<compile_context>
chip_gen: v7x
topology: tpu7x:2x2x1
jax: 0.10.0
libtpu: 0.0.40
codegen_flags: <defaults>
</compile_context>

<pallas_src>
import jax
import jax.numpy as jnp
from jax.experimental import pallas as pl
from jax.experimental.pallas import tpu as pltpu

_Q = 8  # sublane-aligned column offset of the image interior inside the halo scratch


def _halo_dims(h, w, k):
    p = k // 2
    hp = h + 2 * p
    wp = -(-(_Q + w + p) // 8) * 8      # round scratch width up to a sublane multiple
    return hp, wp


def _pick_row_tile(h, w):
    # Keep the (RB, W, 128) f32 accumulator small enough to stay resident in
    # vregs (roughly RB*W <= 256 elements -> <= 32 vregs per 128-lane slice).
    for cand in (8, 4, 2, 1):
        if h % cand == 0 and cand * w <= 256:
            return cand
    return 1


def _pick_c_tile(c_pad, b, h, w, itemsize):
    # Lane-dense 128-channel tiles; grow the tile for small feature maps to
    # amortize per-grid-step overhead, but keep >=2 grid steps for megacore.
    for ct in (512, 384, 256, 128):
        if c_pad % ct:
            continue
        if ct == 128:
            return ct
        if h * w * ct * itemsize <= (1 << 20) and b * (c_pad // ct) >= 2:
            return ct
    return 128


def _vmem_limit_bytes(needed):
    try:
        cap = int(getattr(pltpu.get_tpu_info(), "vmem_capacity_bytes", 64 * 2**20))
    except Exception:
        cap = 64 * 2**20
    hard_cap = max(16 * 2**20, min(100 * 2**20, int(cap * 0.85)))
    return int(min(max(2 * needed, 16 * 2**20), hard_cap))


def _make_kernel(H, W, C_TILE, K, RB):
    P = K // 2
    HP, WP = _halo_dims(H, W, K)
    NRB = H // RB

    def kernel(x_ref, w_ref, b_ref, o_ref, pad_ref):
        # x_ref:   (H, W, C_TILE)   unpadded input tile
        # w_ref:   (K, K, C_TILE)   depthwise weights
        # b_ref:   (1, C_TILE)      bias
        # o_ref:   (H, W, C_TILE)
        # pad_ref: (HP, WP, C_TILE) f32 VMEM halo scratch; the image interior lives
        #          at rows [P, P+H), cols [_Q, _Q+W)  (sublane-aligned column base).

        # Zero only the thin halo border strips; the interior is fully overwritten
        # by the copy below on every grid step (scratch persists across steps).
        zr = jnp.zeros((P, WP, C_TILE), jnp.float32)
        pad_ref[pl.ds(0, P), :, :] = zr                       # top halo rows
        pad_ref[pl.ds(P + H, P), :, :] = zr                   # bottom halo rows
        pad_ref[pl.ds(P, H), pl.ds(0, _Q), :] = jnp.zeros(    # left cols (aligned)
            (H, _Q, C_TILE), jnp.float32)
        pad_ref[pl.ds(P, H), pl.ds(_Q + W, WP - _Q - W), :] = jnp.zeros(
            (H, WP - _Q - W, C_TILE), jnp.float32)            # right cols

        # Sublane-aligned interior copy; f32 cast hoisted here (taps read f32).
        pad_ref[pl.ds(P, H), pl.ds(_Q, W), :] = x_ref[...].astype(jnp.float32)

        # Cast + broadcast weights/bias once per grid step (JAX does not CSE
        # broadcast_in_dim inside the row loop).  Residual x is folded into the
        # centre tap:  x + conv(x) == conv'(x)  with  w'[P,P] = w[P,P] + 1.
        w_f32 = w_ref[...].astype(jnp.float32)
        w_planes = []
        for di in range(K):
            for dj in range(K):
                wt = w_f32[di:di + 1, dj:dj + 1, :]           # (1, 1, C_TILE)
                if di == P and dj == P:
                    wt = wt + 1.0
                w_planes.append(jnp.broadcast_to(wt, (1, W, C_TILE)))
        b_plane = jnp.broadcast_to(
            b_ref[...].astype(jnp.float32).reshape(1, 1, C_TILE), (1, W, C_TILE))

        @pl.loop(0, NRB)
        def _(r):
            r0 = pl.multiple_of(r * RB, RB)
            acc = None
            for di in range(K):
                for dj in range(K):
                    # Load each tap straight from the scratch: the (sub)lane shift
                    # rides on the vld unit, keeping the VALU free for mul+add.
                    tap = pad_ref[pl.ds(r0 + di, RB), pl.ds(_Q - P + dj, W), :]
                    prod = tap * w_planes[di * K + dj]
                    # Bias folded into the first tap's add (no zero init).
                    acc = (prod + b_plane) if acc is None else (acc + prod)
            o_ref[pl.ds(r0, RB), :, :] = acc.astype(o_ref.dtype)

    return kernel


def conv_pos_enc(x, size, weight, bias, k=3):
    """ConvPosEnc forward.

    x:      (B, N, C) with N = H*W
    size:   (H, W)
    weight: (C, K, K)  depthwise conv weights (PyTorch (C,1,K,K) squeezed)
    bias:   (C,)
    returns x + DWConv(x) + bias, shape (B, N, C)
    """
    B, N, C = x.shape
    H, W = size
    assert N == H * W
    assert k % 2 == 1 and k // 2 <= _Q

    # Lane-dense channels: pad C up to a multiple of 128 on the host so every
    # output store is an unmasked full-lane vst (biggest lane-density lever).
    C_pad = -(-C // 128) * 128
    if C_pad != C:
        x = jnp.pad(x, ((0, 0), (0, 0), (0, C_pad - C)))
        weight = jnp.pad(weight, ((0, C_pad - C), (0, 0), (0, 0)))
        bias = jnp.pad(bias, ((0, C_pad - C),))

    itemsize = jnp.dtype(x.dtype).itemsize
    c_tile = _pick_c_tile(C_pad, B, H, W, itemsize)
    n_ct = C_pad // c_tile
    RB = _pick_row_tile(H, W)
    HP, WP = _halo_dims(H, W, k)

    x_img = x.reshape(B, H, W, C_pad)             # NHWC, no HBM-side padding
    w_hwc = jnp.transpose(weight, (1, 2, 0))      # (K, K, C)
    b_2d = bias.reshape(1, C_pad)

    blk_io = H * W * c_tile * itemsize            # one input / output tile
    blk_par = (k * k + 1) * c_tile * itemsize
    blk_scr = HP * WP * c_tile * 4                # f32 halo scratch
    vmem_needed = 4 * blk_io + 2 * blk_par + blk_scr
    vmem_limit = _vmem_limit_bytes(vmem_needed)
    # TODO(synk): add an H-tiled grid axis (manual halo DMA) for very large
    # feature maps whose full-image footprint exceeds v7x's 64 MiB VMEM.

    flops = 2 * k * k * B * H * W * C_pad
    bytes_accessed = 2 * B * H * W * C_pad * itemsize + (k * k + 1) * C_pad * itemsize

    out = pl.pallas_call(
        _make_kernel(H, W, c_tile, k, RB),
        out_shape=jax.ShapeDtypeStruct((B, H, W, C_pad), x.dtype),
        grid=(B, n_ct),
        in_specs=[
            pl.BlockSpec((None, H, W, c_tile), lambda b, c: (b, 0, 0, c)),
            pl.BlockSpec((k, k, c_tile), lambda b, c: (0, 0, c)),
            pl.BlockSpec((1, c_tile), lambda b, c: (0, c)),
        ],
        out_specs=pl.BlockSpec((None, H, W, c_tile), lambda b, c: (b, 0, 0, c)),
        scratch_shapes=[
            pltpu.VMEM((HP, WP, c_tile), jnp.float32),
        ],
        compiler_params=pltpu.CompilerParams(
            dimension_semantics=("parallel", "parallel"),
            vmem_limit_bytes=vmem_limit,
        ),
        cost_estimate=pl.CostEstimate(
            flops=flops, transcendentals=0, bytes_accessed=bytes_accessed),
    )(x_img, w_hwc, b_2d)

    out = out.reshape(B, N, C_pad)
    if C_pad != C:
        out = out[:, :, :C]
    return out


def _reference(x, size, weight, bias, k=3):
    """Pure-JAX reference (matches PyTorch nn.Conv2d(groups=dim) semantics)."""
    B, N, C = x.shape
    H, W = size
    feat = jnp.transpose(x, (0, 2, 1)).reshape(B, C, H, W)   # NCHW
    w = weight.reshape(C, 1, k, k)                           # depthwise (C,1,K,K)
    conv = jax.lax.conv_general_dilated(
        feat, w, window_strides=(1, 1), padding=[(k // 2, k // 2)] * 2,
        dimension_numbers=("NCHW", "OIHW", "NCHW"),
        feature_group_count=C)
    conv = conv + bias.reshape(1, C, 1, 1)
    conv = conv.reshape(B, C, H * W).transpose(0, 2, 1)
    return x + conv


if __name__ == "__main__":
    B, C, H, W = 2, 4, 16, 16
    N = H * W
    k = 3

    key = jax.random.PRNGKey(0)
    kx, kw, kb = jax.random.split(key, 3)
    x = jax.random.normal(kx, (B, N, C), dtype=jnp.float32)
    # Conv2d(dim, dim, 3, groups=dim): weight (C,1,3,3) squeezed to (C,3,3), bias (C,)
    weight = jax.random.normal(kw, (C, k, k), dtype=jnp.float32) * 0.1
    bias = jax.random.normal(kb, (C,), dtype=jnp.float32) * 0.1

    out = conv_pos_enc(x, (H, W), weight, bias, k=k)
    out = jax.block_until_ready(out)

    ref = _reference(x, (H, W), weight, bias, k=k)
    assert out.shape == (B, N, C)
    assert jnp.allclose(out, ref, atol=1e-4, rtol=1e-4), "mismatch vs reference"

    print("KERNEL_OK")
</pallas_src>

<mosaic_0001>
module attributes {stable_mosaic.version = 11 : i64} {
  func.func @kernel(%arg0: i32, %arg1: i32, %arg2: memref<1x16x16x128xf32, #tpu.memory_space<vmem>>, %arg3: memref<3x3x128xf32, #tpu.memory_space<vmem>>, %arg4: memref<1x128xf32, #tpu.memory_space<vmem>>, %arg5: memref<1x16x16x128xf32, #tpu.memory_space<vmem>>, %arg6: memref<18x32x128xf32, #tpu.memory_space<vmem>>) attributes {dimension_semantics = [#tpu.dimension_semantics<parallel>, #tpu.dimension_semantics<parallel>], iteration_bounds = array<i64: 2, 1>, scalar_prefetch = 0 : i64, scratch_operands = 1 : i64, tpu.core_type = #tpu.core_type<tc>, window_params = [{transform_indices = @transform_0, window_bounds = array<i64: 1, 16, 16, 128>}, {transform_indices = @transform_1, window_bounds = array<i64: 3, 3, 128>}, {transform_indices = @transform_2, window_bounds = array<i64: 1, 128>}, {transform_indices = @transform_3, window_bounds = array<i64: 1, 16, 16, 128>}]} {
    %cst = arith.constant 0.000000e+00 : f32
    %0 = vector.broadcast %cst : f32 to vector<1x32x128xf32>
    %c0 = arith.constant 0 : index
    %c0_0 = arith.constant 0 : index
    %c0_1 = arith.constant 0 : index
    %1 = vector.load %arg6[%c0, %c0_0, %c0_1] : memref<18x32x128xf32, #tpu.memory_space<vmem>>, vector<1x32x128xf32>
    tpu.vector_store %arg6[%c0, %c0_0, %c0_1], %0 {strides = array<i32>} : memref<18x32x128xf32, #tpu.memory_space<vmem>>, vector<1x32x128xf32>,
    %c17 = arith.constant 17 : index
    %c0_2 = arith.constant 0 : index
    %c0_3 = arith.constant 0 : index
    %2 = vector.load %arg6[%c17, %c0_2, %c0_3] : memref<18x32x128xf32, #tpu.memory_space<vmem>>, vector<1x32x128xf32>
    tpu.vector_store %arg6[%c17, %c0_2, %c0_3], %0 {strides = array<i32>} : memref<18x32x128xf32, #tpu.memory_space<vmem>>, vector<1x32x128xf32>,
    %cst_4 = arith.constant 0.000000e+00 : f32
    %3 = vector.broadcast %cst_4 : f32 to vector<16x8x128xf32>
    %c1 = arith.constant 1 : index
    %c0_5 = arith.constant 0 : index
    %c0_6 = arith.constant 0 : index
    %4 = vector.load %arg6[%c1, %c0_5, %c0_6] : memref<18x32x128xf32, #tpu.memory_space<vmem>>, vector<16x8x128xf32>
    tpu.vector_store %arg6[%c1, %c0_5, %c0_6], %3 {strides = array<i32>} : memref<18x32x128xf32, #tpu.memory_space<vmem>>, vector<16x8x128xf32>,
    %cst_7 = arith.constant 0.000000e+00 : f32
    %5 = vector.broadcast %cst_7 : f32 to vector<16x8x128xf32>
    %c1_8 = arith.constant 1 : index
    %c24 = arith.constant 24 : index
    %c0_9 = arith.constant 0 : index
    %6 = vector.load %arg6[%c1_8, %c24, %c0_9] : memref<18x32x128xf32, #tpu.memory_space<vmem>>, vector<16x8x128xf32>
    tpu.vector_store %arg6[%c1_8, %c24, %c0_9], %5 {strides = array<i32>} : memref<18x32x128xf32, #tpu.memory_space<vmem>>, vector<16x8x128xf32>,
    %c0_10 = arith.constant 0 : index
    %c0_11 = arith.constant 0 : index
    %c0_12 = arith.constant 0 : index
    %c0_13 = arith.constant 0 : index
    %7 = vector.load %arg2[%c0_10, %c0_11, %c0_12, %c0_13] : memref<1x16x16x128xf32, #tpu.memory_space<vmem>>, vector<1x16x16x128xf32>
    %8 = vector.shape_cast %7 : vector<1x16x16x128xf32> to vector<16x16x128xf32>
    %c1_14 = arith.constant 1 : index
    %c8 = arith.constant 8 : index
    %c0_15 = arith.constant 0 : index
    %9 = vector.load %arg6[%c1_14, %c8, %c0_15] : memref<18x32x128xf32, #tpu.memory_space<vmem>>, vector<16x16x128xf32>
    tpu.vector_store %arg6[%c1_14, %c8, %c0_15], %8 {strides = array<i32>} : memref<18x32x128xf32, #tpu.memory_space<vmem>>, vector<16x16x128xf32>,
    %c0_16 = arith.constant 0 : index
    %c0_17 = arith.constant 0 : index
    %c0_18 = arith.constant 0 : index
    %10 = vector.load %arg3[%c0_16, %c0_17, %c0_18] : memref<3x3x128xf32, #tpu.memory_space<vmem>>, vector<3x3x128xf32>
    %11 = vector.extract_strided_slice %10 {offsets = [0, 0, 0], sizes = [1, 1, 128], strides = [1, 1, 1]} : vector<3x3x128xf32> to vector<1x1x128xf32>
    %12 = vector.shape_cast %11 : vector<1x1x128xf32> to vector<1x1x128xf32>
    %13 = vector.broadcast %12 : vector<1x1x128xf32> to vector<1x16x128xf32>
    %14 = vector.extract_strided_slice %10 {offsets = [0, 1, 0], sizes = [1, 1, 128], strides = [1, 1, 1]} : vector<3x3x128xf32> to vector<1x1x128xf32>
    %15 = vector.shape_cast %14 : vector<1x1x128xf32> to vector<1x1x128xf32>
    %16 = vector.broadcast %15 : vector<1x1x128xf32> to vector<1x16x128xf32>
    %17 = vector.extract_strided_slice %10 {offsets = [0, 2, 0], sizes = [1, 1, 128], strides = [1, 1, 1]} : vector<3x3x128xf32> to vector<1x1x128xf32>
    %18 = vector.shape_cast %17 : vector<1x1x128xf32> to vector<1x1x128xf32>
    %19 = vector.broadcast %18 : vector<1x1x128xf32> to vector<1x16x128xf32>
    %20 = vector.extract_strided_slice %10 {offsets = [1, 0, 0], sizes = [1, 1, 128], strides = [1, 1, 1]} : vector<3x3x128xf32> to vector<1x1x128xf32>
    %21 = vector.shape_cast %20 : vector<1x1x128xf32> to vector<1x1x128xf32>
    %22 = vector.broadcast %21 : vector<1x1x128xf32> to vector<1x16x128xf32>
    %23 = vector.extract_strided_slice %10 {offsets = [1, 1, 0], sizes = [1, 1, 128], strides = [1, 1, 1]} : vector<3x3x128xf32> to vector<1x1x128xf32>
    %cst_19 = arith.constant 1.000000e+00 : f32
    %24 = vector.broadcast %cst_19 : f32 to vector<1x1x128xf32>
    %25 = arith.addf %23, %24 : vector<1x1x128xf32>
    %26 = vector.shape_cast %25 : vector<1x1x128xf32> to vector<1x1x128xf32>
    %27 = vector.broadcast %26 : vector<1x1x128xf32> to vector<1x16x128xf32>
    %28 = vector.extract_strided_slice %10 {offsets = [1, 2, 0], sizes = [1, 1, 128], strides = [1, 1, 1]} : vector<3x3x128xf32> to vector<1x1x128xf32>
    %29 = vector.shape_cast %28 : vector<1x1x128xf32> to vector<1x1x128xf32>
    %30 = vector.broadcast %29 : vector<1x1x128xf32> to vector<1x16x128xf32>
    %31 = vector.extract_strided_slice %10 {offsets = [2, 0, 0], sizes = [1, 1, 128], strides = [1, 1, 1]} : vector<3x3x128xf32> to vector<1x1x128xf32>
    %32 = vector.shape_cast %31 : vector<1x1x128xf32> to vector<1x1x128xf32>
    %33 = vector.broadcast %32 : vector<1x1x128xf32> to vector<1x16x128xf32>
    %34 = vector.extract_strided_slice %10 {offsets = [2, 1, 0], sizes = [1, 1, 128], strides = [1, 1, 1]} : vector<3x3x128xf32> to vector<1x1x128xf32>
    %35 = vector.shape_cast %34 : vector<1x1x128xf32> to vector<1x1x128xf32>
    %36 = vector.broadcast %35 : vector<1x1x128xf32> to vector<1x16x128xf32>
    %37 = vector.extract_strided_slice %10 {offsets = [2, 2, 0], sizes = [1, 1, 128], strides = [1, 1, 1]} : vector<3x3x128xf32> to vector<1x1x128xf32>
    %38 = vector.shape_cast %37 : vector<1x1x128xf32> to vector<1x1x128xf32>
    %39 = vector.broadcast %38 : vector<1x1x128xf32> to vector<1x16x128xf32>
    %c0_20 = arith.constant 0 : index
    %c0_21 = arith.constant 0 : index
    %40 = vector.load %arg4[%c0_20, %c0_21] : memref<1x128xf32, #tpu.memory_space<vmem>>, vector<1x128xf32>
    %41 = vector.shape_cast %40 : vector<1x128xf32> to vector<1x1x128xf32>
    %42 = vector.shape_cast %41 : vector<1x1x128xf32> to vector<1x1x128xf32>
    %43 = vector.broadcast %42 : vector<1x1x128xf32> to vector<1x16x128xf32>
    %c0_i32 = arith.constant 0 : i32
    %c2_i32 = arith.constant 2 : i32
    %44 = arith.addi %c0_i32, %c2_i32 : i32
    %c1_i32 = arith.constant 1 : i32
    scf.for %arg7 = %c0_i32 to %44 step %c1_i32  : i32 {
      %c1_i32_23 = arith.constant 1 : i32
      %45 = arith.muli %arg7, %c1_i32_23 : i32
      %c0_i32_24 = arith.constant 0 : i32
      %46 = arith.addi %c0_i32_24, %45 : i32
      %c8_i32 = arith.constant 8 : i32
      %47 = arith.muli %46, %c8_i32 : i32
      %48 = tpu.assume_multiple %47, 8 : i32
      %c0_i32_25 = arith.constant 0 : i32
      %49 = arith.addi %48, %c0_i32_25 : i32
      %50 = arith.index_cast %49 : i32 to index
      %c7 = arith.constant 7 : index
      %c0_26 = arith.constant 0 : index
      %51 = vector.load %arg6[%50, %c7, %c0_26] : memref<18x32x128xf32, #tpu.memory_space<vmem>>, vector<8x16x128xf32>
      %52 = vector.broadcast %13 : vector<1x16x128xf32> to vector<8x16x128xf32>
      %53 = arith.mulf %51, %52 : vector<8x16x128xf32>
      %54 = vector.broadcast %43 : vector<1x16x128xf32> to vector<8x16x128xf32>
      %55 = arith.addf %53, %54 : vector<8x16x128xf32>
      %c0_i32_27 = arith.constant 0 : i32
      %56 = arith.addi %48, %c0_i32_27 : i32
      %57 = arith.index_cast %56 : i32 to index
      %c8_28 = arith.constant 8 : index
      %c0_29 = arith.constant 0 : index
      %58 = vector.load %arg6[%57, %c8_28, %c0_29] : memref<18x32x128xf32, #tpu.memory_space<vmem>>, vector<8x16x128xf32>
      %59 = vector.broadcast %16 : vector<1x16x128xf32> to vector<8x16x128xf32>
      %60 = arith.mulf %58, %59 : vector<8x16x128xf32>
      %61 = arith.addf %55, %60 : vector<8x16x128xf32>
      %c0_i32_30 = arith.constant 0 : i32
      %62 = arith.addi %48, %c0_i32_30 : i32
      %63 = arith.index_cast %62 : i32 to index
      %c9 = arith.constant 9 : index
      %c0_31 = arith.constant 0 : index
      %64 = vector.load %arg6[%63, %c9, %c0_31] : memref<18x32x128xf32, #tpu.memory_space<vmem>>, vector<8x16x128xf32>
      %65 = vector.broadcast %19 : vector<1x16x128xf32> to vector<8x16x128xf32>
      %66 = arith.mulf %64, %65 : vector<8x16x128xf32>
      %67 = arith.addf %61, %66 : vector<8x16x128xf32>
      %c1_i32_32 = arith.constant 1 : i32
      %68 = arith.addi %48, %c1_i32_32 : i32
      %69 = arith.index_cast %68 : i32 to index
      %c7_33 = arith.constant 7 : index
      %c0_34 = arith.constant 0 : index
      %70 = vector.load %arg6[%69, %c7_33, %c0_34] : memref<18x32x128xf32, #tpu.memory_space<vmem>>, vector<8x16x128xf32>
      %71 = vector.broadcast %22 : vector<1x16x128xf32> to vector<8x16x128xf32>
      %72 = arith.mulf %70, %71 : vector<8x16x128xf32>
      %73 = arith.addf %67, %72 : vector<8x16x128xf32>
      %c1_i32_35 = arith.constant 1 : i32
      %74 = arith.addi %48, %c1_i32_35 : i32
      %75 = arith.index_cast %74 : i32 to index
      %c8_36 = arith.constant 8 : index
      %c0_37 = arith.constant 0 : index
      %76 = vector.load %arg6[%75, %c8_36, %c0_37] : memref<18x32x128xf32, #tpu.memory_space<vmem>>, vector<8x16x128xf32>
      %77 = vector.broadcast %27 : vector<1x16x128xf32> to vector<8x16x128xf32>
      %78 = arith.mulf %76, %77 : vector<8x16x128xf32>
      %79 = arith.addf %73, %78 : vector<8x16x128xf32>
      %c1_i32_38 = arith.constant 1 : i32
      %80 = arith.addi %48, %c1_i32_38 : i32
      %81 = arith.index_cast %80 : i32 to index
      %c9_39 = arith.constant 9 : index
      %c0_40 = arith.constant 0 : index
      %82 = vector.load %arg6[%81, %c9_39, %c0_40] : memref<18x32x128xf32, #tpu.memory_space<vmem>>, vector<8x16x128xf32>
      %83 = vector.broadcast %30 : vector<1x16x128xf32> to vector<8x16x128xf32>
      %84 = arith.mulf %82, %83 : vector<8x16x128xf32>
      %85 = arith.addf %79, %84 : vector<8x16x128xf32>
      %c2_i32_41 = arith.constant 2 : i32
      %86 = arith.addi %48, %c2_i32_41 : i32
      %87 = arith.index_cast %86 : i32 to index
      %c7_42 = arith.constant 7 : index
      %c0_43 = arith.constant 0 : index
      %88 = vector.load %arg6[%87, %c7_42, %c0_43] : memref<18x32x128xf32, #tpu.memory_space<vmem>>, vector<8x16x128xf32>
      %89 = vector.broadcast %33 : vector<1x16x128xf32> to vector<8x16x128xf32>
      %90 = arith.mulf %88, %89 : vector<8x16x128xf32>
      %91 = arith.addf %85, %90 : vector<8x16x128xf32>
      %c2_i32_44 = arith.constant 2 : i32
      %92 = arith.addi %48, %c2_i32_44 : i32
      %93 = arith.index_cast %92 : i32 to index
      %c8_45 = arith.constant 8 : index
      %c0_46 = arith.constant 0 : index
      %94 = vector.load %arg6[%93, %c8_45, %c0_46] : memref<18x32x128xf32, #tpu.memory_space<vmem>>, vector<8x16x128xf32>
      %95 = vector.broadcast %36 : vector<1x16x128xf32> to vector<8x16x128xf32>
      %96 = arith.mulf %94, %95 : vector<8x16x128xf32>
      %97 = arith.addf %91, %96 : vector<8x16x128xf32>
      %c2_i32_47 = arith.constant 2 : i32
      %98 = arith.addi %48, %c2_i32_47 : i32
      %99 = arith.index_cast %98 : i32 to index
      %c9_48 = arith.constant 9 : index
      %c0_49 = arith.constant 0 : index
      %100 = vector.load %arg6[%99, %c9_48, %c0_49] : memref<18x32x128xf32, #tpu.memory_space<vmem>>, vector<8x16x128xf32>
      %101 = vector.broadcast %39 : vector<1x16x128xf32> to vector<8x16x128xf32>
      %102 = arith.mulf %100, %101 : vector<8x16x128xf32>
      %103 = arith.addf %97, %102 : vector<8x16x128xf32>
      %c0_50 = arith.constant 0 : index
      %104 = arith.index_cast %48 : i32 to index
      %c0_51 = arith.constant 0 : index
      %c0_52 = arith.constant 0 : index
      %105 = vector.load %arg5[%c0_50, %104, %c0_51, %c0_52] : memref<1x16x16x128xf32, #tpu.memory_space<vmem>>, vector<1x8x16x128xf32>
      %106 = vector.shape_cast %105 : vector<1x8x16x128xf32> to vector<8x16x128xf32>
      %107 = vector.shape_cast %103 : vector<8x16x128xf32> to vector<1x8x16x128xf32>
      tpu.vector_store %arg5[%c0_50, %104, %c0_51, %c0_52], %107 {strides = array<i32>} : memref<1x16x16x128xf32, #tpu.memory_space<vmem>>, vector<1x8x16x128xf32>,
    }
    %c2_i32_22 = arith.constant 2 : i32
    return
  }
  func.func @transform_0(%arg0: i32, %arg1: i32) -> (i32, i32, i32, i32) {
    %c0_i32 = arith.constant 0 : i32
    %c0_i32_0 = arith.constant 0 : i32
    %c0_i32_1 = arith.constant 0 : i32
    return %arg0, %c0_i32, %c0_i32_0, %arg1 : i32, i32, i32, i32
  }
  func.func @transform_1(%arg0: i32, %arg1: i32) -> (i32, i32, i32) {
    %c0_i32 = arith.constant 0 : i32
    %c0_i32_0 = arith.constant 0 : i32
    %c0_i32_1 = arith.constant 0 : i32
    return %c0_i32, %c0_i32_0, %arg1 : i32, i32, i32
  }
  func.func @transform_2(%arg0: i32, %arg1: i32) -> (i32, i32) {
    %c0_i32 = arith.constant 0 : i32
    %c0_i32_0 = arith.constant 0 : i32
    return %c0_i32, %arg1 : i32, i32
  }
  func.func @transform_3(%arg0: i32, %arg1: i32) -> (i32, i32, i32, i32) {
    %c0_i32 = arith.constant 0 : i32
    %c0_i32_0 = arith.constant 0 : i32
    %c0_i32_1 = arith.constant 0 : i32
    return %arg0, %c0_i32, %c0_i32_0, %arg1 : i32, i32, i32, i32
  }
}

</mosaic_0001>

<llo_original>
// kernel: tpu_custom_call.1
$region0: #{tpu_custom_call.1}
  #allocation0 [shape = 'u32[]', space=smem, size = 0x4, offset = 0x4, fixed_abs, tag = 'smem constant byte address 0x4 - core index']
  #allocation1 [shape = 'u32[144,128]{1,0:T(1,128)}', space=vmem, size = 0x12000, scoped, tag = 'internal scratch']
  #allocation2 [shape = 'f32[18,32,128]{2,1,0:T(8,128)}', space=vmem, size = 0x48000, scoped, tag = 'scratch operand']
  %s0 = inlined_call_operand.hbm [shape: f32[2,16,16,128], index: 0, kind: input, shape index: {}]
  %s1 = inlined_call_operand.hbm [shape: f32[3,3,128], index: 1, kind: input, shape index: {}]
  %s2 = inlined_call_operand.vmem [shape: f32[1,128], index: 2, kind: input, shape index: {}]
  %s3 = inlined_call_operand.hbm [shape: f32[2,16,16,128], index: 3, kind: output, shape index: {}]
  %s4 = sld [smem:[#allocation0]]
  $region60: #{tpu_custom_call.1} parent=0
    _
  %s6 = ssub.s32 1, %s4
  %s7 = scalar_select 0, %s6, %s4
  $region1: #{tpu_custom_call.1} parent=0
    #allocation3 [shape = 'u8[262144]{0}', space=vmem, size = 0x40000, scoped, tag = 'input window, operand 0']
    #allocation4 [shape = 's32[2]{0}', space=sflag, size = 0x8, scoped, tag = 'scoped memory for tpu_custom_call.1']
    #allocation5 [shape = 's32[2]{0}', space=sflag, size = 0x8, scoped, tag = 'scoped memory for tpu_custom_call.1']
    #allocation6 [shape = 'u8[6144]{0}', space=vmem, size = 0x1800, scoped, tag = 'input window, operand 1, single buffered']
    #allocation7 [shape = 's32[1]{0}', space=sflag, size = 0x4, scoped, tag = 'scoped memory for tpu_custom_call.1']
    #allocation8 [shape = 'u8[262144]{0}', space=vmem, size = 0x40000, scoped, tag = 'output window, operand 0']
    %8 = vsyncpa [#allocation4], 0
    %s9 = scalar_lea.sflag [#allocation4], 1
    %10 = vsyncpa %s9, 0
    %11 = vsyncpa [#allocation7], 0
    %12 = vsyncpa [#allocation5], 0
    %s13 = scalar_lea.sflag [#allocation5], 1
    %14 = vsyncpa %s13, 0
    loop: start=0, step=1, limit=4
    $region2: #{tpu_custom_call.1} parent=1 // loop_pre_header
      _
    $region3: #{tpu_custom_call.1} parent=1 // loop_header
      %s16 = sphi 0, %s20
      %p17 = scmp.ge.s32.totalorder %s16, 4
      %s23 = sphi 0, %s35
      %s24 = sphi 0, %s31
      %s25 = sphi 0, %s23
      %s26 = sphi 0, %s24
      %s27 = sphi 0, %s25
      %s28 = sphi 0, %s26
      %s40 = sphi 0, %s42
      %s43 = sphi 0, %s40
      %s44 = sphi 0, %s43
      %s60 = sphi 0, %s44
      %s66 = sphi 0, %s68
      %s69 = sphi 0, %s66
      %s70 = sphi 0, %s69
      %s86 = sphi 0, %s70
      %s92 = sphi 0, %s94
      %s95 = sphi 0, %s92
      %s96 = sphi 0, %s95
      %s112 = sphi 0, %s96
      %s120 = sphi 0, %s122
      %s123 = sphi 0, %s120
      %s124 = sphi 0, %s123
      %s140 = sphi 0, %s124
    $region4: #{tpu_custom_call.1} parent=1 // loop_header_branch
      %19 = sbr.rel (%p17) target = $region8
    $region5: #{tpu_custom_call.1} parent=1 // loop_body
      %s21 = ssub.s32 %s16, 1
      %s22 = ssub.s32 %s16, 2
      %s29 = sadd.s32 1, %s24
      %p30 = scmp.ge.s32.totalorder %s29, 1
      %s31 = scalar_select %p30, 0, %s29
      %s32 = sadd.s32 1, %s23
      %s33 = scalar_select %p30, %s32, %s23
      %p34 = scmp.ge.s32.totalorder %s33, 2
      %s35 = scalar_select %p34, 0, %s33
      %s36 = ssub.s32 %s23, %s35
      %s37 = ssub.s32 %s24, %s31
      %s38 = sor.u32 %s36, %s37
      %p39 = scmp.eq.s32.totalorder %s38, 0
      %s41 = sadd.s32 %s40, 1
      %s42 = scalar_select %p39, %s40, %s41
      %p45 = pneg %p39
      %p46 = scmp.eq.s32.totalorder %s16, 1
      %p47 = por %p45, %p46
      %p48 = scmp.ne.s32.totalorder %s40, %s43
      %p49 = scmp.eq.s32.totalorder %s16, 0
      %p50 = por %p48, %p49
      %p51 = scmp.ne.s32.totalorder %s40, %s43
      %p52 = scmp.eq.s32.totalorder %s21, 1
      %p53 = por %p51, %p52
      %p54 = scmp.ne.s32.totalorder %s43, %s44
      %p55 = scmp.eq.s32.totalorder %s21, 0
      %p56 = por %p54, %p55
      %p57 = scmp.ne.s32.totalorder %s43, %s44
      %p58 = scmp.eq.s32.totalorder %s22, 1
      %p59 = por %p57, %p58
      %p61 = scmp.ne.s32.totalorder %s44, %s60
      %p62 = scmp.eq.s32.totalorder %s22, 0
      %p63 = por %p61, %p62
      %s64 = ssub.s32 %s24, %s31
      %p65 = scmp.eq.s32.totalorder %s64, 0
      %s67 = sadd.s32 %s66, 1
      %s68 = scalar_select %p65, %s66, %s67
      %p71 = pneg %p65
      %p72 = scmp.eq.s32.totalorder %s16, 1
      %p73 = por %p71, %p72
      %p74 = scmp.ne.s32.totalorder %s66, %s69
      %p75 = scmp.eq.s32.totalorder %s16, 0
      %p76 = por %p74, %p75
      %p77 = scmp.ne.s32.totalorder %s66, %s69
      %p78 = scmp.eq.s32.totalorder %s21, 1
      %p79 = por %p77, %p78
      %p80 = scmp.ne.s32.totalorder %s69, %s70
      %p81 = scmp.eq.s32.totalorder %s21, 0
      %p82 = por %p80, %p81
      %p83 = scmp.ne.s32.totalorder %s69, %s70
      %p84 = scmp.eq.s32.totalorder %s22, 1
      %p85 = por %p83, %p84
      %p87 = scmp.ne.s32.totalorder %s70, %s86
      %p88 = scmp.eq.s32.totalorder %s22, 0
      %p89 = por %p87, %p88
      %s90 = ssub.s32 %s24, %s31
      %p91 = scmp.eq.s32.totalorder %s90, 0
      %s93 = sadd.s32 %s92, 1
      %s94 = scalar_select %p91, %s92, %s93
      %p97 = pneg %p91
      %p98 = scmp.eq.s32.totalorder %s16, 1
      %p99 = por %p97, %p98
      %p100 = scmp.ne.s32.totalorder %s92, %s95
      %p101 = scmp.eq.s32.totalorder %s16, 0
      %p102 = por %p100, %p101
      %p103 = scmp.ne.s32.totalorder %s92, %s95
      %p104 = scmp.eq.s32.totalorder %s21, 1
      %p105 = por %p103, %p104
      %p106 = scmp.ne.s32.totalorder %s95, %s96
      %p107 = scmp.eq.s32.totalorder %s21, 0
      %p108 = por %p106, %p107
      %p109 = scmp.ne.s32.totalorder %s95, %s96
      %p110 = scmp.eq.s32.totalorder %s22, 1
      %p111 = por %p109, %p110
      %p113 = scmp.ne.s32.totalorder %s96, %s112
      %p114 = scmp.eq.s32.totalorder %s22, 0
      %p115 = por %p113, %p114
      %s116 = ssub.s32 %s23, %s35
      %s117 = ssub.s32 %s24, %s31
      %s118 = sor.u32 %s116, %s117
      %p119 = scmp.eq.s32.totalorder %s118, 0
      %s121 = sadd.s32 %s120, 1
      %s122 = scalar_select %p119, %s120, %s121
      %p125 = pneg %p119
      %p126 = scmp.eq.s32.totalorder %s16, 1
      %p127 = por %p125, %p126
      %p128 = scmp.ne.s32.totalorder %s120, %s123
      %p129 = scmp.eq.s32.totalorder %s16, 0
      %p130 = por %p128, %p129
      %p131 = scmp.ne.s32.totalorder %s120, %s123
      %p132 = scmp.eq.s32.totalorder %s21, 1
      %p133 = por %p131, %p132
      %p134 = scmp.ne.s32.totalorder %s123, %s124
      %p135 = scmp.eq.s32.totalorder %s21, 0
      %p136 = por %p134, %p135
      %p137 = scmp.ne.s32.totalorder %s123, %s124
      %p138 = scmp.eq.s32.totalorder %s22, 1
      %p139 = por %p137, %p138
      %p141 = scmp.ne.s32.totalorder %s124, %s140
      %p142 = scmp.eq.s32.totalorder %s22, 0
      %p143 = por %p141, %p142
      %p144 = scmp.le.s32.totalorder 1, %s16
      %p145 = scmp.lt.s32.totalorder %s16, 3
      %p146 = pnand %p144, %p145
      %p147 = pneg %p146
      // Predicated region
      $region9: #{tpu_custom_call.1} parent=5 // pred_check
        _
      $region10: #{tpu_custom_call.1} parent=5 // pred_check_branch
        %149 = sbr.rel (%p146) target = $region12
      $region11: #{tpu_custom_call.1} parent=5 // pred_region
        %s150 = ssub.s32 %s16, 1
        // Predicated region
        $region13: #{tpu_custom_call.1} parent=11 // pred_check
          %p151 = pneg %p82
        $region14: #{tpu_custom_call.1} parent=11 // pred_check_branch
          %153 = sbr.rel (%p151) target = $region16
        $region15: #{tpu_custom_call.1} parent=11 // pred_region
          %s155 = ssub.s32 192, 192
          %156 = vsyncadd [#allocation7], %s155
          %s157 = smul.addr %s26, 64
          %s158 = scalar_lea.hbm %s1, %s157
          %s159 = sshll.u32 [#allocation6], 4
          %s160 = int_to_ptr.vmem [resolvable:$true] %s159
          %165 = dma.hbm_to_vmem [thread:$0]  %s158, 192, %s160, [#allocation7], 64, 64, 4
        $region16: #{tpu_custom_call.1} parent=11 // pred_fallthru
          _
        // Predicated region
        $region17: #{tpu_custom_call.1} parent=11 // pred_check
          %p166 = pneg %p108
        $region18: #{tpu_custom_call.1} parent=11 // pred_check_branch
          %168 = sbr.rel (%p166) target = $region20
        $region19: #{tpu_custom_call.1} parent=11 // pred_region
          %p169 = scmp.lt.s32.totalorder %s26, 0
          %s170 = scalar_select %p169, %s26, 0
          %s171 = scalar_lea.vmem %s2, %s170
        $region20: #{tpu_custom_call.1} parent=11 // pred_fallthru
          _
      $region12: #{tpu_custom_call.1} parent=5 // pred_fallthru
        _
      %p172 = scmp.lt.s32.totalorder %s16, 2
      // Predicated region
      $region21: #{tpu_custom_call.1} parent=5 // pred_check
        %p173 = pneg %p172
      $region22: #{tpu_custom_call.1} parent=5 // pred_check_branch
        %175 = sbr.rel (%p173) target = $region24
      $region23: #{tpu_custom_call.1} parent=5 // pred_region
        // Predicated region
        $region25: #{tpu_custom_call.1} parent=23 // pred_check
          %p176 = pneg %p50
        $region26: #{tpu_custom_call.1} parent=23 // pred_check_branch
          %178 = sbr.rel (%p176) target = $region28
        $region27: #{tpu_custom_call.1} parent=23 // pred_region
          %s179 = sand.u32 %s40, 1
          %s180 = scalar_lea.sflag [#allocation4], %s179
          %s181 = sand.u32 %s40, 1
          %s182 = smul.addr %s181, 256
          %s183 = scalar_lea.vmem [#allocation3], %s182
          %s185 = ssub.s32 4096, 4096
          %186 = vsyncadd %s180, %s185
          %s187 = smul.addr %s23, 32
          %s188 = sadd.s32 %s24, %s187
          %s189 = smul.addr %s188, 128
          %s190 = scalar_lea.hbm %s0, %s189
          %s191 = sshll.u32 %s183, 4
          %s192 = int_to_ptr.vmem [resolvable:$true] %s191
          %197 = dma.hbm_to_vmem [thread:$0]  %s190, 4096, %s192, %s180, 128, 128, 8
        $region28: #{tpu_custom_call.1} parent=23 // pred_fallthru
          _
      $region24: #{tpu_custom_call.1} parent=5 // pred_fallthru
        _
      %p198 = scmp.le.s32.totalorder 1, %s16
      %p199 = scmp.lt.s32.totalorder %s16, 3
      %p200 = pnand %p198, %p199
      %p201 = pneg %p200
      // Predicated region
      $region29: #{tpu_custom_call.1} parent=5 // pred_check
        _
      $region30: #{tpu_custom_call.1} parent=5 // pred_check_branch
        %203 = sbr.rel (%p200) target = $region32
      $region31: #{tpu_custom_call.1} parent=5 // pred_region
        %s204 = ssub.s32 %s16, 1
        %s205 = sand.u32 %s43, 1
        %s206 = scalar_lea.sflag [#allocation4], %s205
        %s207 = sand.u32 %s43, 1
        %s208 = smul.addr %s207, 256
        %s209 = scalar_lea.vmem [#allocation3], %s208
        // Predicated region
        $region33: #{tpu_custom_call.1} parent=31 // pred_check
          %p210 = pneg %p56
        $region34: #{tpu_custom_call.1} parent=31 // pred_check_branch
          %212 = sbr.rel (%p210) target = $region36
        $region35: #{tpu_custom_call.1} parent=31 // pred_region
          %213 = dma.done %s206, 4096
        $region36: #{tpu_custom_call.1} parent=31 // pred_fallthru
          _
        // Predicated region
        $region37: #{tpu_custom_call.1} parent=31 // pred_check
          %p214 = pneg %p82
        $region38: #{tpu_custom_call.1} parent=31 // pred_check_branch
          %216 = sbr.rel (%p214) target = $region40
        $region39: #{tpu_custom_call.1} parent=31 // pred_region
          %217 = dma.done [#allocation7], 192
        $region40: #{tpu_custom_call.1} parent=31 // pred_fallthru
          _
        %s218 = sand.u32 %s43, 1
        %s219 = scalar_lea.sflag [#allocation4], %s218
        %s220 = sand.u32 %s43, 1
        %s221 = smul.addr %s220, 256
        %s222 = scalar_lea.vmem [#allocation3], %s221
        %p223 = pneg %p56
        %p224 = pneg %p53
        %p225 = pneg %p82
        %p226 = pneg %p79
        %p227 = scmp.lt.s32.totalorder %s26, 0
        %s228 = scalar_select %p227, %s26, 0
        %s229 = scalar_lea.vmem %s2, %s228
        %p230 = pneg %p108
        %p231 = pneg %p105
        %p232 = pneg %p136
        %p233 = pneg %p133
        %s234 = sand.u32 %s123, 1
        %s235 = scalar_lea.sflag [#allocation5], %s234
        %s236 = sand.u32 %s123, 1
        %s237 = smul.addr %s236, 256
        %s238 = scalar_lea.vmem [#allocation8], %s237
        %p239 = scmp.lt.s32.totalorder %s26, 0
        %s240 = scalar_select %p239, %s26, 0
        %s241 = scalar_lea.vmem %s2, %s240
        %242 = vst [vmem:[#allocation2] sm:$0xff] 0.0
        %243 = vst [vmem:[#allocation2 + $0x8] sm:$0xff] 0.0
        %244 = vst [vmem:[#allocation2 + $0x10] sm:$0xff] 0.0
        %245 = vst [vmem:[#allocation2 + $0x18] sm:$0xff] 0.0
        %s246 = scalar_lea.vmem [#allocation2], 544
        %247 = vst [vmem:[%s246] sm:$0xff] 0.0
        %248 = vst [vmem:[%s246 + $0x8] sm:$0xff] 0.0
        %249 = vst [vmem:[%s246 + $0x10] sm:$0xff] 0.0
        %250 = vst [vmem:[%s246 + $0x18] sm:$0xff] 0.0
        %s251 = scalar_lea.vmem [#allocation2], 32
        %252 = vst [vmem:[%s251] sm:$0xff] 0.0
        %253 = vst [vmem:[%s251 + $0x20] sm:$0xff] 0.0
        %254 = vst [vmem:[%s251 + $0x40] sm:$0xff] 0.0
        %255 = vst [vmem:[%s251 + $0x60] sm:$0xff] 0.0
        %256 = vst [vmem:[%s251 + $0x80] sm:$0xff] 0.0
        %257 = vst [vmem:[%s251 + $0xa0] sm:$0xff] 0.0
        %258 = vst [vmem:[%s251 + $0xc0] sm:$0xff] 0.0
        %259 = vst [vmem:[%s251 + $0xe0] sm:$0xff] 0.0
        %260 = vst [vmem:[%s251 + $0x100] sm:$0xff] 0.0
        %261 = vst [vmem:[%s251 + $0x120] sm:$0xff] 0.0
        %262 = vst [vmem:[%s251 + $0x140] sm:$0xff] 0.0
        %263 = vst [vmem:[%s251 + $0x160] sm:$0xff] 0.0
        %264 = vst [vmem:[%s251 + $0x180] sm:$0xff] 0.0
        %265 = vst [vmem:[%s251 + $0x1a0] sm:$0xff] 0.0
        %266 = vst [vmem:[%s251 + $0x1c0] sm:$0xff] 0.0
        %267 = vst [vmem:[%s251 + $0x1e0] sm:$0xff] 0.0
        %268 = vst [vmem:[%s251 + $0x18] sm:$0xff] 0.0
        %269 = vst [vmem:[%s251 + $0x38] sm:$0xff] 0.0
        %270 = vst [vmem:[%s251 + $0x58] sm:$0xff] 0.0
        %271 = vst [vmem:[%s251 + $0x78] sm:$0xff] 0.0
        %272 = vst [vmem:[%s251 + $0x98] sm:$0xff] 0.0
        %273 = vst [vmem:[%s251 + $0xb8] sm:$0xff] 0.0
        %274 = vst [vmem:[%s251 + $0xd8] sm:$0xff] 0.0
        %275 = vst [vmem:[%s251 + $0xf8] sm:$0xff] 0.0
        %276 = vst [vmem:[%s251 + $0x118] sm:$0xff] 0.0
        %277 = vst [vmem:[%s251 + $0x138] sm:$0xff] 0.0
        %278 = vst [vmem:[%s251 + $0x158] sm:$0xff] 0.0
        %279 = vst [vmem:[%s251 + $0x178] sm:$0xff] 0.0
        %280 = vst [vmem:[%s251 + $0x198] sm:$0xff] 0.0
        %281 = vst [vmem:[%s251 + $0x1b8] sm:$0xff] 0.0
        %282 = vst [vmem:[%s251 + $0x1d8] sm:$0xff] 0.0
        %283 = vst [vmem:[%s251 + $0x1f8] sm:$0xff] 0.0
        %v284 = vld [vmem:[%s209] sm:$0xff]
        %v285 = vld [vmem:[%s209 + $0x8] sm:$0xff]
        %v286 = vld [vmem:[%s209 + $0x10] sm:$0xff]
        %v287 = vld [vmem:[%s209 + $0x18] sm:$0xff]
        %v288 = vld [vmem:[%s209 + $0x20] sm:$0xff]
        %v289 = vld [vmem:[%s209 + $0x28] sm:$0xff]
        %v290 = vld [vmem:[%s209 + $0x30] sm:$0xff]
        %v291 = vld [vmem:[%s209 + $0x38] sm:$0xff]
        %v292 = vld [vmem:[%s209 + $0x40] sm:$0xff]
        %v293 = vld [vmem:[%s209 + $0x48] sm:$0xff]
        %v294 = vld [vmem:[%s209 + $0x50] sm:$0xff]
        %v295 = vld [vmem:[%s209 + $0x58] sm:$0xff]
        %v296 = vld [vmem:[%s209 + $0x60] sm:$0xff]
        %v297 = vld [vmem:[%s209 + $0x68] sm:$0xff]
        %v298 = vld [vmem:[%s209 + $0x70] sm:$0xff]
        %v299 = vld [vmem:[%s209 + $0x78] sm:$0xff]
        %v300 = vld [vmem:[%s209 + $0x80] sm:$0xff]
        %v301 = vld [vmem:[%s209 + $0x88] sm:$0xff]
        %v302 = vld [vmem:[%s209 + $0x90] sm:$0xff]
        %v303 = vld [vmem:[%s209 + $0x98] sm:$0xff]
        %v304 = vld [vmem:[%s209 + $0xa0] sm:$0xff]
        %v305 = vld [vmem:[%s209 + $0xa8] sm:$0xff]
        %v306 = vld [vmem:[%s209 + $0xb0] sm:$0xff]
        %v307 = vld [vmem:[%s209 + $0xb8] sm:$0xff]
        %v308 = vld [vmem:[%s209 + $0xc0] sm:$0xff]
        %v309 = vld [vmem:[%s209 + $0xc8] sm:$0xff]
        %v310 = vld [vmem:[%s209 + $0xd0] sm:$0xff]
        %v311 = vld [vmem:[%s209 + $0xd8] sm:$0xff]
        %v312 = vld [vmem:[%s209 + $0xe0] sm:$0xff]
        %v313 = vld [vmem:[%s209 + $0xe8] sm:$0xff]
        %v314 = vld [vmem:[%s209 + $0xf0] sm:$0xff]
        %v315 = vld [vmem:[%s209 + $0xf8] sm:$0xff]
        %316 = vst [vmem:[%s251 + $0x8] sm:$0xff] %v284
        %317 = vst [vmem:[%s251 + $0x10] sm:$0xff] %v285
        %318 = vst [vmem:[%s251 + $0x28] sm:$0xff] %v286
        %319 = vst [vmem:[%s251 + $0x30] sm:$0xff] %v287
        %320 = vst [vmem:[%s251 + $0x48] sm:$0xff] %v288
        %321 = vst [vmem:[%s251 + $0x50] sm:$0xff] %v289
        %322 = vst [vmem:[%s251 + $0x68] sm:$0xff] %v290
        %323 = vst [vmem:[%s251 + $0x70] sm:$0xff] %v291
        %324 = vst [vmem:[%s251 + $0x88] sm:$0xff] %v292
        %325 = vst [vmem:[%s251 + $0x90] sm:$0xff] %v293
        %326 = vst [vmem:[%s251 + $0xa8] sm:$0xff] %v294
        %327 = vst [vmem:[%s251 + $0xb0] sm:$0xff] %v295
        %328 = vst [vmem:[%s251 + $0xc8] sm:$0xff] %v296
        %329 = vst [vmem:[%s251 + $0xd0] sm:$0xff] %v297
        %330 = vst [vmem:[%s251 + $0xe8] sm:$0xff] %v298
        %331 = vst [vmem:[%s251 + $0xf0] sm:$0xff] %v299
        %332 = vst [vmem:[%s251 + $0x108] sm:$0xff] %v300
        %333 = vst [vmem:[%s251 + $0x110] sm:$0xff] %v301
        %334 = vst [vmem:[%s251 + $0x128] sm:$0xff] %v302
        %335 = vst [vmem:[%s251 + $0x130] sm:$0xff] %v303
        %336 = vst [vmem:[%s251 + $0x148] sm:$0xff] %v304
        %337 = vst [vmem:[%s251 + $0x150] sm:$0xff] %v305
        %338 = vst [vmem:[%s251 + $0x168] sm:$0xff] %v306
        %339 = vst [vmem:[%s251 + $0x170] sm:$0xff] %v307
        %340 = vst [vmem:[%s251 + $0x188] sm:$0xff] %v308
        %341 = vst [vmem:[%s251 + $0x190] sm:$0xff] %v309
        %342 = vst [vmem:[%s251 + $0x1a8] sm:$0xff] %v310
        %343 = vst [vmem:[%s251 + $0x1b0] sm:$0xff] %v311
        %344 = vst [vmem:[%s251 + $0x1c8] sm:$0xff] %v312
        %345 = vst [vmem:[%s251 + $0x1d0] sm:$0xff] %v313
        %346 = vst [vmem:[%s251 + $0x1e8] sm:$0xff] %v314
        %347 = vst [vmem:[%s251 + $0x1f0] sm:$0xff] %v315
        %v348 = vld [vmem:[#allocation6] sm:$0x7]
        %v349 = vld [vmem:[#allocation6 + $0x4] sm:$0x7]
        %v350 = vld [vmem:[#allocation6 + $0x8] sm:$0x7]
        %v351 = vadd.f32 %v349, 1.0
        %v352 = vld [vmem:[%s241] sm:$0x1]
        loop: start=0, step=1, limit=2
        $region41: #{tpu_custom_call.1} parent=31 // loop_pre_header
          _
        $region42: #{tpu_custom_call.1} parent=31 // loop_header
          %s354 = sphi 0, %s358
          %p355 = scmp.ge.s32.totalorder %s354, 2
        $region43: #{tpu_custom_call.1} parent=31 // loop_header_branch
          %357 = sbr.rel (%p355) target = $region47
        $region44: #{tpu_custom_call.1} parent=31 // loop_body
          %s359 = smul.u32 %s354, 8
          %s360 = smul.u32 %s359, 32
          %s361 = scalar_lea.vmem [#allocation2], %s360
          %v362 = vld [vmem:[%s361 + $0x7] sm:$0xff]
          %v363 = vld [vmem:[%s361 + $0xf] sm:$0xff]
          %v364 = vld [vmem:[%s361 + $0x27] sm:$0xff]
          %v365 = vld [vmem:[%s361 + $0x2f] sm:$0xff]
          %v366 = vld [vmem:[%s361 + $0x47] sm:$0xff]
          %v367 = vld [vmem:[%s361 + $0x4f] sm:$0xff]
          %v368 = vld [vmem:[%s361 + $0x67] sm:$0xff]
          %v369 = vld [vmem:[%s361 + $0x6f] sm:$0xff]
          %v370 = vld [vmem:[%s361 + $0x87] sm:$0xff]
          %v371 = vld [vmem:[%s361 + $0x8f] sm:$0xff]
          %v372 = vld [vmem:[%s361 + $0xa7] sm:$0xff]
          %v373 = vld [vmem:[%s361 + $0xaf] sm:$0xff]
          %v374 = vld [vmem:[%s361 + $0xc7] sm:$0xff]
          %v375 = vld [vmem:[%s361 + $0xcf] sm:$0xff]
          %v376 = vld [vmem:[%s361 + $0xe7] sm:$0xff]
          %v377 = vld [vmem:[%s361 + $0xef] sm:$0xff]
          %v378 = vlaneseq
          %v379 = vshrl.u32 %v378, 7
          %v380 = vsub.s32 0, %v379
          %v381 = vrot.slane %v348, %v380
          %v382 = vmul.f32 %v362, %v381
          %v383 = vmul.f32 %v363, %v381
          %v384 = vmul.f32 %v364, %v381
          %v385 = vmul.f32 %v365, %v381
          %v386 = vmul.f32 %v366, %v381
          %v387 = vmul.f32 %v367, %v381
          %v388 = vmul.f32 %v368, %v381
          %v389 = vmul.f32 %v369, %v381
          %v390 = vmul.f32 %v370, %v381
          %v391 = vmul.f32 %v371, %v381
          %v392 = vmul.f32 %v372, %v381
          %v393 = vmul.f32 %v373, %v381
          %v394 = vmul.f32 %v374, %v381
          %v395 = vmul.f32 %v375, %v381
          %v396 = vmul.f32 %v376, %v381
          %v397 = vmul.f32 %v377, %v381
          %v399 = vlaneseq
          %v400 = vshrl.u32 %v399, 7
          %v401 = vsub.s32 0, %v400
          %v402 = vrot.slane %v352, %v401
          %v404 = vadd.f32 %v382, %v402
          %v405 = vadd.f32 %v383, %v402
          %v406 = vadd.f32 %v384, %v402
          %v407 = vadd.f32 %v385, %v402
          %v408 = vadd.f32 %v386, %v402
          %v409 = vadd.f32 %v387, %v402
          %v410 = vadd.f32 %v388, %v402
          %v411 = vadd.f32 %v389, %v402
          %v412 = vadd.f32 %v390, %v402
          %v413 = vadd.f32 %v391, %v402
          %v414 = vadd.f32 %v392, %v402
          %v415 = vadd.f32 %v393, %v402
          %v416 = vadd.f32 %v394, %v402
          %v417 = vadd.f32 %v395, %v402
          %v418 = vadd.f32 %v396, %v402
          %v419 = vadd.f32 %v397, %v402
          %v420 = vld [vmem:[%s361 + $0x8] sm:$0xff]
          %v421 = vld [vmem:[%s361 + $0x10] sm:$0xff]
          %v422 = vld [vmem:[%s361 + $0x28] sm:$0xff]
          %v423 = vld [vmem:[%s361 + $0x30] sm:$0xff]
          %v424 = vld [vmem:[%s361 + $0x48] sm:$0xff]
          %v425 = vld [vmem:[%s361 + $0x50] sm:$0xff]
          %v426 = vld [vmem:[%s361 + $0x68] sm:$0xff]
          %v427 = vld [vmem:[%s361 + $0x70] sm:$0xff]
          %v428 = vld [vmem:[%s361 + $0x88] sm:$0xff]
          %v429 = vld [vmem:[%s361 + $0x90] sm:$0xff]
          %v430 = vld [vmem:[%s361 + $0xa8] sm:$0xff]
          %v431 = vld [vmem:[%s361 + $0xb0] sm:$0xff]
          %v432 = vld [vmem:[%s361 + $0xc8] sm:$0xff]
          %v433 = vld [vmem:[%s361 + $0xd0] sm:$0xff]
          %v434 = vld [vmem:[%s361 + $0xe8] sm:$0xff]
          %v435 = vld [vmem:[%s361 + $0xf0] sm:$0xff]
          %v436 = vlaneseq
          %v437 = vshrl.u32 %v436, 7
          %v438 = vsub.s32 1, %v437
          %v439 = vrot.slane %v348, %v438
          %v440 = vmul.f32 %v420, %v439
          %v441 = vmul.f32 %v421, %v439
          %v442 = vmul.f32 %v422, %v439
          %v443 = vmul.f32 %v423, %v439
          %v444 = vmul.f32 %v424, %v439
          %v445 = vmul.f32 %v425, %v439
          %v446 = vmul.f32 %v426, %v439
          %v447 = vmul.f32 %v427, %v439
          %v448 = vmul.f32 %v428, %v439
          %v449 = vmul.f32 %v429, %v439
          %v450 = vmul.f32 %v430, %v439
          %v451 = vmul.f32 %v431, %v439
          %v452 = vmul.f32 %v432, %v439
          %v453 = vmul.f32 %v433, %v439
          %v454 = vmul.f32 %v434, %v439
          %v455 = vmul.f32 %v435, %v439
          %v456 = vadd.f32 %v404, %v440
          %v457 = vadd.f32 %v405, %v441
          %v458 = vadd.f32 %v406, %v442
          %v459 = vadd.f32 %v407, %v443
          %v460 = vadd.f32 %v408, %v444
          %v461 = vadd.f32 %v409, %v445
          %v462 = vadd.f32 %v410, %v446
          %v463 = vadd.f32 %v411, %v447
          %v464 = vadd.f32 %v412, %v448
          %v465 = vadd.f32 %v413, %v449
          %v466 = vadd.f32 %v414, %v450
          %v467 = vadd.f32 %v415, %v451
          %v468 = vadd.f32 %v416, %v452
          %v469 = vadd.f32 %v417, %v453
          %v470 = vadd.f32 %v418, %v454
          %v471 = vadd.f32 %v419, %v455
          %v472 = vld [vmem:[%s361 + $0x9] sm:$0xff]
          %v473 = vld [vmem:[%s361 + $0x11] sm:$0xff]
          %v474 = vld [vmem:[%s361 + $0x29] sm:$0xff]
          %v475 = vld [vmem:[%s361 + $0x31] sm:$0xff]
          %v476 = vld [vmem:[%s361 + $0x49] sm:$0xff]
          %v477 = vld [vmem:[%s361 + $0x51] sm:$0xff]
          %v478 = vld [vmem:[%s361 + $0x69] sm:$0xff]
          %v479 = vld [vmem:[%s361 + $0x71] sm:$0xff]
          %v480 = vld [vmem:[%s361 + $0x89] sm:$0xff]
          %v481 = vld [vmem:[%s361 + $0x91] sm:$0xff]
          %v482 = vld [vmem:[%s361 + $0xa9] sm:$0xff]
          %v483 = vld [vmem:[%s361 + $0xb1] sm:$0xff]
          %v484 = vld [vmem:[%s361 + $0xc9] sm:$0xff]
          %v485 = vld [vmem:[%s361 + $0xd1] sm:$0xff]
          %v486 = vld [vmem:[%s361 + $0xe9] sm:$0xff]
          %v487 = vld [vmem:[%s361 + $0xf1] sm:$0xff]
          %v488 = vlaneseq
          %v489 = vshrl.u32 %v488, 7
          %v490 = vsub.s32 2, %v489
          %v491 = vrot.slane %v348, %v490
          %v492 = vmul.f32 %v472, %v491
          %v493 = vmul.f32 %v473, %v491
          %v494 = vmul.f32 %v474, %v491
          %v495 = vmul.f32 %v475, %v491
          %v496 = vmul.f32 %v476, %v491
          %v497 = vmul.f32 %v477, %v491
          %v498 = vmul.f32 %v478, %v491
          %v499 = vmul.f32 %v479, %v491
          %v500 = vmul.f32 %v480, %v491
          %v501 = vmul.f32 %v481, %v491
          %v502 = vmul.f32 %v482, %v491
          %v503 = vmul.f32 %v483, %v491
          %v504 = vmul.f32 %v484, %v491
          %v505 = vmul.f32 %v485, %v491
          %v506 = vmul.f32 %v486, %v491
          %v507 = vmul.f32 %v487, %v491
          %v508 = vadd.f32 %v456, %v492
          %v509 = vadd.f32 %v457, %v493
          %v510 = vadd.f32 %v458, %v494
          %v511 = vadd.f32 %v459, %v495
          %v512 = vadd.f32 %v460, %v496
          %v513 = vadd.f32 %v461, %v497
          %v514 = vadd.f32 %v462, %v498
          %v515 = vadd.f32 %v463, %v499
          %v516 = vadd.f32 %v464, %v500
          %v517 = vadd.f32 %v465, %v501
          %v518 = vadd.f32 %v466, %v502
          %v519 = vadd.f32 %v467, %v503
          %v520 = vadd.f32 %v468, %v504
          %v521 = vadd.f32 %v469, %v505
          %v522 = vadd.f32 %v470, %v506
          %v523 = vadd.f32 %v471, %v507
          %s524 = sadd.s32 %s359, 1
          %s525 = smul.u32 %s524, 32
          %s526 = scalar_lea.vmem [#allocation2], %s525
          %v527 = vld [vmem:[%s526 + $0x7] sm:$0xff]
          %v528 = vld [vmem:[%s526 + $0xf] sm:$0xff]
          %v529 = vld [vmem:[%s526 + $0x27] sm:$0xff]
          %v530 = vld [vmem:[%s526 + $0x2f] sm:$0xff]
          %v531 = vld [vmem:[%s526 + $0x47] sm:$0xff]
          %v532 = vld [vmem:[%s526 + $0x4f] sm:$0xff]
          %v533 = vld [vmem:[%s526 + $0x67] sm:$0xff]
          %v534 = vld [vmem:[%s526 + $0x6f] sm:$0xff]
          %v535 = vld [vmem:[%s526 + $0x87] sm:$0xff]
          %v536 = vld [vmem:[%s526 + $0x8f] sm:$0xff]
          %v537 = vld [vmem:[%s526 + $0xa7] sm:$0xff]
          %v538 = vld [vmem:[%s526 + $0xaf] sm:$0xff]
          %v539 = vld [vmem:[%s526 + $0xc7] sm:$0xff]
          %v540 = vld [vmem:[%s526 + $0xcf] sm:$0xff]
          %v541 = vld [vmem:[%s526 + $0xe7] sm:$0xff]
          %v542 = vld [vmem:[%s526 + $0xef] sm:$0xff]
          %v543 = vlaneseq
          %v544 = vshrl.u32 %v543, 7
          %v545 = vsub.s32 0, %v544
          %v546 = vrot.slane %v349, %v545
          %v547 = vmul.f32 %v527, %v546
          %v548 = vmul.f32 %v528, %v546
          %v549 = vmul.f32 %v529, %v546
          %v550 = vmul.f32 %v530, %v546
          %v551 = vmul.f32 %v531, %v546
          %v552 = vmul.f32 %v532, %v546
          %v553 = vmul.f32 %v533, %v546
          %v554 = vmul.f32 %v534, %v546
          %v555 = vmul.f32 %v535, %v546
          %v556 = vmul.f32 %v536, %v546
          %v557 = vmul.f32 %v537, %v546
          %v558 = vmul.f32 %v538, %v546
          %v559 = vmul.f32 %v539, %v546
          %v560 = vmul.f32 %v540, %v546
          %v561 = vmul.f32 %v541, %v546
          %v562 = vmul.f32 %v542, %v546
          %v563 = vadd.f32 %v508, %v547
          %v564 = vadd.f32 %v509, %v548
          %v565 = vadd.f32 %v510, %v549
          %v566 = vadd.f32 %v511, %v550
          %v567 = vadd.f32 %v512, %v551
          %v568 = vadd.f32 %v513, %v552
          %v569 = vadd.f32 %v514, %v553
          %v570 = vadd.f32 %v515, %v554
          %v571 = vadd.f32 %v516, %v555
          %v572 = vadd.f32 %v517, %v556
          %v573 = vadd.f32 %v518, %v557
          %v574 = vadd.f32 %v519, %v558
          %v575 = vadd.f32 %v520, %v559
          %v576 = vadd.f32 %v521, %v560
          %v577 = vadd.f32 %v522, %v561
          %v578 = vadd.f32 %v523, %v562
          %v579 = vld [vmem:[%s526 + $0x8] sm:$0xff]
          %v580 = vld [vmem:[%s526 + $0x10] sm:$0xff]
          %v581 = vld [vmem:[%s526 + $0x28] sm:$0xff]
          %v582 = vld [vmem:[%s526 + $0x30] sm:$0xff]
          %v583 = vld [vmem:[%s526 + $0x48] sm:$0xff]
          %v584 = vld [vmem:[%s526 + $0x50] sm:$0xff]
          %v585 = vld [vmem:[%s526 + $0x68] sm:$0xff]
          %v586 = vld [vmem:[%s526 + $0x70] sm:$0xff]
          %v587 = vld [vmem:[%s526 + $0x88] sm:$0xff]
          %v588 = vld [vmem:[%s526 + $0x90] sm:$0xff]
          %v589 = vld [vmem:[%s526 + $0xa8] sm:$0xff]
          %v590 = vld [vmem:[%s526 + $0xb0] sm:$0xff]
          %v591 = vld [vmem:[%s526 + $0xc8] sm:$0xff]
          %v592 = vld [vmem:[%s526 + $0xd0] sm:$0xff]
          %v593 = vld [vmem:[%s526 + $0xe8] sm:$0xff]
          %v594 = vld [vmem:[%s526 + $0xf0] sm:$0xff]
          %v595 = vlaneseq
          %v596 = vshrl.u32 %v595, 7
          %v597 = vsub.s32 1, %v596
          %v598 = vrot.slane %v351, %v597
          %v599 = vmul.f32 %v579, %v598
          %v600 = vmul.f32 %v580, %v598
          %v601 = vmul.f32 %v581, %v598
          %v602 = vmul.f32 %v582, %v598
          %v603 = vmul.f32 %v583, %v598
          %v604 = vmul.f32 %v584, %v598
          %v605 = vmul.f32 %v585, %v598
          %v606 = vmul.f32 %v586, %v598
          %v607 = vmul.f32 %v587, %v598
          %v608 = vmul.f32 %v588, %v598
          %v609 = vmul.f32 %v589, %v598
          %v610 = vmul.f32 %v590, %v598
          %v611 = vmul.f32 %v591, %v598
          %v612 = vmul.f32 %v592, %v598
          %v613 = vmul.f32 %v593, %v598
          %v614 = vmul.f32 %v594, %v598
          %v615 = vadd.f32 %v563, %v599
          %v616 = vadd.f32 %v564, %v600
          %v617 = vadd.f32 %v565, %v601
          %v618 = vadd.f32 %v566, %v602
          %v619 = vadd.f32 %v567, %v603
          %v620 = vadd.f32 %v568, %v604
          %v621 = vadd.f32 %v569, %v605
          %v622 = vadd.f32 %v570, %v606
          %v623 = vadd.f32 %v571, %v607
          %v624 = vadd.f32 %v572, %v608
          %v625 = vadd.f32 %v573, %v609
          %v626 = vadd.f32 %v574, %v610
          %v627 = vadd.f32 %v575, %v611
          %v628 = vadd.f32 %v576, %v612
          %v629 = vadd.f32 %v577, %v613
          %v630 = vadd.f32 %v578, %v614
          %v631 = vld [vmem:[%s526 + $0x9] sm:$0xff]
          %v632 = vld [vmem:[%s526 + $0x11] sm:$0xff]
          %v633 = vld [vmem:[%s526 + $0x29] sm:$0xff]
          %v634 = vld [vmem:[%s526 + $0x31] sm:$0xff]
          %v635 = vld [vmem:[%s526 + $0x49] sm:$0xff]
          %v636 = vld [vmem:[%s526 + $0x51] sm:$0xff]
          %v637 = vld [vmem:[%s526 + $0x69] sm:$0xff]
          %v638 = vld [vmem:[%s526 + $0x71] sm:$0xff]
          %v639 = vld [vmem:[%s526 + $0x89] sm:$0xff]
          %v640 = vld [vmem:[%s526 + $0x91] sm:$0xff]
          %v641 = vld [vmem:[%s526 + $0xa9] sm:$0xff]
          %v642 = vld [vmem:[%s526 + $0xb1] sm:$0xff]
          %v643 = vld [vmem:[%s526 + $0xc9] sm:$0xff]
          %v644 = vld [vmem:[%s526 + $0xd1] sm:$0xff]
          %v645 = vld [vmem:[%s526 + $0xe9] sm:$0xff]
          %v646 = vld [vmem:[%s526 + $0xf1] sm:$0xff]
          %v647 = vlaneseq
          %v648 = vshrl.u32 %v647, 7
          %v649 = vsub.s32 2, %v648
          %v650 = vrot.slane %v349, %v649
          %v651 = vmul.f32 %v631, %v650
          %v652 = vmul.f32 %v632, %v650
          %v653 = vmul.f32 %v633, %v650
          %v654 = vmul.f32 %v634, %v650
          %v655 = vmul.f32 %v635, %v650
          %v656 = vmul.f32 %v636, %v650
          %v657 = vmul.f32 %v637, %v650
          %v658 = vmul.f32 %v638, %v650
          %v659 = vmul.f32 %v639, %v650
          %v660 = vmul.f32 %v640, %v650
          %v661 = vmul.f32 %v641, %v650
          %v662 = vmul.f32 %v642, %v650
          %v663 = vmul.f32 %v643, %v650
          %v664 = vmul.f32 %v644, %v650
          %v665 = vmul.f32 %v645, %v650
          %v666 = vmul.f32 %v646, %v650
          %v667 = vadd.f32 %v615, %v651
          %v668 = vadd.f32 %v616, %v652
          %v669 = vadd.f32 %v617, %v653
          %v670 = vadd.f32 %v618, %v654
          %v671 = vadd.f32 %v619, %v655
          %v672 = vadd.f32 %v620, %v656
          %v673 = vadd.f32 %v621, %v657
          %v674 = vadd.f32 %v622, %v658
          %v675 = vadd.f32 %v623, %v659
          %v676 = vadd.f32 %v624, %v660
          %v677 = vadd.f32 %v625, %v661
          %v678 = vadd.f32 %v626, %v662
          %v679 = vadd.f32 %v627, %v663
          %v680 = vadd.f32 %v628, %v664
          %v681 = vadd.f32 %v629, %v665
          %v682 = vadd.f32 %v630, %v666
          %s683 = sadd.s32 %s359, 2
          %s684 = smul.u32 %s683, 32
          %s685 = scalar_lea.vmem [#allocation2], %s684
          %v686 = vld [vmem:[%s685 + $0x7] sm:$0xff]
          %v687 = vld [vmem:[%s685 + $0xf] sm:$0xff]
          %v688 = vld [vmem:[%s685 + $0x27] sm:$0xff]
          %v689 = vld [vmem:[%s685 + $0x2f] sm:$0xff]
          %v690 = vld [vmem:[%s685 + $0x47] sm:$0xff]
          %v691 = vld [vmem:[%s685 + $0x4f] sm:$0xff]
          %v692 = vld [vmem:[%s685 + $0x67] sm:$0xff]
          %v693 = vld [vmem:[%s685 + $0x6f] sm:$0xff]
          %v694 = vld [vmem:[%s685 + $0x87] sm:$0xff]
          %v695 = vld [vmem:[%s685 + $0x8f] sm:$0xff]
          %v696 = vld [vmem:[%s685 + $0xa7] sm:$0xff]
          %v697 = vld [vmem:[%s685 + $0xaf] sm:$0xff]
          %v698 = vld [vmem:[%s685 + $0xc7] sm:$0xff]
          %v699 = vld [vmem:[%s685 + $0xcf] sm:$0xff]
          %v700 = vld [vmem:[%s685 + $0xe7] sm:$0xff]
          %v701 = vld [vmem:[%s685 + $0xef] sm:$0xff]
          %v702 = vlaneseq
          %v703 = vshrl.u32 %v702, 7
          %v704 = vsub.s32 0, %v703
          %v705 = vrot.slane %v350, %v704
          %v706 = vmul.f32 %v686, %v705
          %v707 = vmul.f32 %v687, %v705
          %v708 = vmul.f32 %v688, %v705
          %v709 = vmul.f32 %v689, %v705
          %v710 = vmul.f32 %v690, %v705
          %v711 = vmul.f32 %v691, %v705
          %v712 = vmul.f32 %v692, %v705
          %v713 = vmul.f32 %v693, %v705
          %v714 = vmul.f32 %v694, %v705
          %v715 = vmul.f32 %v695, %v705
          %v716 = vmul.f32 %v696, %v705
          %v717 = vmul.f32 %v697, %v705
          %v718 = vmul.f32 %v698, %v705
          %v719 = vmul.f32 %v699, %v705
          %v720 = vmul.f32 %v700, %v705
          %v721 = vmul.f32 %v701, %v705
          %v722 = vadd.f32 %v667, %v706
          %v723 = vadd.f32 %v668, %v707
          %v724 = vadd.f32 %v669, %v708
          %v725 = vadd.f32 %v670, %v709
          %v726 = vadd.f32 %v671, %v710
          %v727 = vadd.f32 %v672, %v711
          %v728 = vadd.f32 %v673, %v712
          %v729 = vadd.f32 %v674, %v713
          %v730 = vadd.f32 %v675, %v714
          %v731 = vadd.f32 %v676, %v715
          %v732 = vadd.f32 %v677, %v716
          %v733 = vadd.f32 %v678, %v717
          %v734 = vadd.f32 %v679, %v718
          %v735 = vadd.f32 %v680, %v719
          %v736 = vadd.f32 %v681, %v720
          %v737 = vadd.f32 %v682, %v721
          %v738 = vld [vmem:[%s685 + $0x8] sm:$0xff]
          %v739 = vld [vmem:[%s685 + $0x10] sm:$0xff]
          %v740 = vld [vmem:[%s685 + $0x28] sm:$0xff]
          %v741 = vld [vmem:[%s685 + $0x30] sm:$0xff]
          %v742 = vld [vmem:[%s685 + $0x48] sm:$0xff]
          %v743 = vld [vmem:[%s685 + $0x50] sm:$0xff]
          %v744 = vld [vmem:[%s685 + $0x68] sm:$0xff]
          %v745 = vld [vmem:[%s685 + $0x70] sm:$0xff]
          %v746 = vld [vmem:[%s685 + $0x88] sm:$0xff]
          %v747 = vld [vmem:[%s685 + $0x90] sm:$0xff]
          %v748 = vld [vmem:[%s685 + $0xa8] sm:$0xff]
          %v749 = vld [vmem:[%s685 + $0xb0] sm:$0xff]
          %v750 = vld [vmem:[%s685 + $0xc8] sm:$0xff]
          %v751 = vld [vmem:[%s685 + $0xd0] sm:$0xff]
          %v752 = vld [vmem:[%s685 + $0xe8] sm:$0xff]
          %v753 = vld [vmem:[%s685 + $0xf0] sm:$0xff]
          %v754 = vlaneseq
          %v755 = vshrl.u32 %v754, 7
          %v756 = vsub.s32 1, %v755
          %v757 = vrot.slane %v350, %v756
          %v758 = vmul.f32 %v738, %v757
          %v759 = vmul.f32 %v739, %v757
          %v760 = vmul.f32 %v740, %v757
          %v761 = vmul.f32 %v741, %v757
          %v762 = vmul.f32 %v742, %v757
          %v763 = vmul.f32 %v743, %v757
          %v764 = vmul.f32 %v744, %v757
          %v765 = vmul.f32 %v745, %v757
          %v766 = vmul.f32 %v746, %v757
          %v767 = vmul.f32 %v747, %v757
          %v768 = vmul.f32 %v748, %v757
          %v769 = vmul.f32 %v749, %v757
          %v770 = vmul.f32 %v750, %v757
          %v771 = vmul.f32 %v751, %v757
          %v772 = vmul.f32 %v752, %v757
          %v773 = vmul.f32 %v753, %v757
          %v774 = vadd.f32 %v722, %v758
          %v775 = vadd.f32 %v723, %v759
          %v776 = vadd.f32 %v724, %v760
          %v777 = vadd.f32 %v725, %v761
          %v778 = vadd.f32 %v726, %v762
          %v779 = vadd.f32 %v727, %v763
          %v780 = vadd.f32 %v728, %v764
          %v781 = vadd.f32 %v729, %v765
          %v782 = vadd.f32 %v730, %v766
          %v783 = vadd.f32 %v731, %v767
          %v784 = vadd.f32 %v732, %v768
          %v785 = vadd.f32 %v733, %v769
          %v786 = vadd.f32 %v734, %v770
          %v787 = vadd.f32 %v735, %v771
          %v788 = vadd.f32 %v736, %v772
          %v789 = vadd.f32 %v737, %v773
          %v790 = vld [vmem:[%s685 + $0x9] sm:$0xff]
          %v791 = vld [vmem:[%s685 + $0x11] sm:$0xff]
          %v792 = vld [vmem:[%s685 + $0x29] sm:$0xff]
          %v793 = vld [vmem:[%s685 + $0x31] sm:$0xff]
          %v794 = vld [vmem:[%s685 + $0x49] sm:$0xff]
          %v795 = vld [vmem:[%s685 + $0x51] sm:$0xff]
          %v796 = vld [vmem:[%s685 + $0x69] sm:$0xff]
          %v797 = vld [vmem:[%s685 + $0x71] sm:$0xff]
          %v798 = vld [vmem:[%s685 + $0x89] sm:$0xff]
          %v799 = vld [vmem:[%s685 + $0x91] sm:$0xff]
          %v800 = vld [vmem:[%s685 + $0xa9] sm:$0xff]
          %v801 = vld [vmem:[%s685 + $0xb1] sm:$0xff]
          %v802 = vld [vmem:[%s685 + $0xc9] sm:$0xff]
          %v803 = vld [vmem:[%s685 + $0xd1] sm:$0xff]
          %v804 = vld [vmem:[%s685 + $0xe9] sm:$0xff]
          %v805 = vld [vmem:[%s685 + $0xf1] sm:$0xff]
          %v806 = vlaneseq
          %v807 = vshrl.u32 %v806, 7
          %v808 = vsub.s32 2, %v807
          %v809 = vrot.slane %v350, %v808
          %v810 = vmul.f32 %v790, %v809
          %v811 = vmul.f32 %v791, %v809
          %v812 = vmul.f32 %v792, %v809
          %v813 = vmul.f32 %v793, %v809
          %v814 = vmul.f32 %v794, %v809
          %v815 = vmul.f32 %v795, %v809
          %v816 = vmul.f32 %v796, %v809
          %v817 = vmul.f32 %v797, %v809
          %v818 = vmul.f32 %v798, %v809
          %v819 = vmul.f32 %v799, %v809
          %v820 = vmul.f32 %v800, %v809
          %v821 = vmul.f32 %v801, %v809
          %v822 = vmul.f32 %v802, %v809
          %v823 = vmul.f32 %v803, %v809
          %v824 = vmul.f32 %v804, %v809
          %v825 = vmul.f32 %v805, %v809
          %v826 = vadd.f32 %v774, %v810
          %v827 = vadd.f32 %v775, %v811
          %v828 = vadd.f32 %v776, %v812
          %v829 = vadd.f32 %v777, %v813
          %v830 = vadd.f32 %v778, %v814
          %v831 = vadd.f32 %v779, %v815
          %v832 = vadd.f32 %v780, %v816
          %v833 = vadd.f32 %v781, %v817
          %v834 = vadd.f32 %v782, %v818
          %v835 = vadd.f32 %v783, %v819
          %v836 = vadd.f32 %v784, %v820
          %v837 = vadd.f32 %v785, %v821
          %v838 = vadd.f32 %v786, %v822
          %v839 = vadd.f32 %v787, %v823
          %v840 = vadd.f32 %v788, %v824
          %v841 = vadd.f32 %v789, %v825
          %s842 = smul.u32 %s359, 16
          %s843 = scalar_lea.vmem %s238, %s842 [#allocation8]
          %844 = vst [vmem:[%s843] sm:$0xff] %v826
          %845 = vst [vmem:[%s843 + $0x8] sm:$0xff] %v827
          %846 = vst [vmem:[%s843 + $0x10] sm:$0xff] %v828
          %847 = vst [vmem:[%s843 + $0x18] sm:$0xff] %v829
          %848 = vst [vmem:[%s843 + $0x20] sm:$0xff] %v830
          %849 = vst [vmem:[%s843 + $0x28] sm:$0xff] %v831
          %850 = vst [vmem:[%s843 + $0x30] sm:$0xff] %v832
          %851 = vst [vmem:[%s843 + $0x38] sm:$0xff] %v833
          %852 = vst [vmem:[%s843 + $0x40] sm:$0xff] %v834
          %853 = vst [vmem:[%s843 + $0x48] sm:$0xff] %v835
          %854 = vst [vmem:[%s843 + $0x50] sm:$0xff] %v836
          %855 = vst [vmem:[%s843 + $0x58] sm:$0xff] %v837
          %856 = vst [vmem:[%s843 + $0x60] sm:$0xff] %v838
          %857 = vst [vmem:[%s843 + $0x68] sm:$0xff] %v839
          %858 = vst [vmem:[%s843 + $0x70] sm:$0xff] %v840
          %859 = vst [vmem:[%s843 + $0x78] sm:$0xff] %v841
        $region45: #{tpu_custom_call.1} parent=31 // loop_footer
          %s358 = sadd.s32 1, %s354
        $region46: #{tpu_custom_call.1} parent=31 // loop_footer_branch
          %353 = sbr.rel target = $region42
        $region47: #{tpu_custom_call.1} parent=31 // loop_exit
          _
        %s860 = sand.u32 %s123, 1
        %s861 = scalar_lea.sflag [#allocation5], %s860
        %s862 = sand.u32 %s123, 1
        %s863 = smul.addr %s862, 256
        %s864 = scalar_lea.vmem [#allocation8], %s863
        // Predicated region
        $region48: #{tpu_custom_call.1} parent=31 // pred_check
          %p865 = pneg %p133
        $region49: #{tpu_custom_call.1} parent=31 // pred_check_branch
          %867 = sbr.rel (%p865) target = $region51
        $region50: #{tpu_custom_call.1} parent=31 // pred_region
          %s869 = ssub.s32 4096, 4096
          %870 = vsyncadd %s861, %s869
          %s871 = smul.addr %s25, 32
          %s872 = sadd.s32 %s26, %s871
          %s873 = smul.addr %s872, 128
          %s874 = scalar_lea.hbm %s3, %s873
          %s875 = sshll.u32 %s864, 4
          %s876 = int_to_ptr.vmem [resolvable:$true] %s875
          %881 = dma.vmem_to_hbm [thread:$0]  %s876, 4096, %s874, %s861, 128, 128, 8
        $region51: #{tpu_custom_call.1} parent=31 // pred_fallthru
          _
      $region32: #{tpu_custom_call.1} parent=5 // pred_fallthru
        _
      %p882 = scmp.le.s32.totalorder 2, %s16
      // Predicated region
      $region52: #{tpu_custom_call.1} parent=5 // pred_check
        %p883 = pneg %p882
      $region53: #{tpu_custom_call.1} parent=5 // pred_check_branch
        %885 = sbr.rel (%p883) target = $region55
      $region54: #{tpu_custom_call.1} parent=5 // pred_region
        %s886 = ssub.s32 %s16, 2
        // Predicated region
        $region56: #{tpu_custom_call.1} parent=54 // pred_check
          %p887 = pneg %p139
        $region57: #{tpu_custom_call.1} parent=54 // pred_check_branch
          %889 = sbr.rel (%p887) target = $region59
        $region58: #{tpu_custom_call.1} parent=54 // pred_region
          %s890 = sand.u32 %s124, 1
          %s891 = scalar_lea.sflag [#allocation5], %s890
          %s892 = sand.u32 %s124, 1
          %s893 = smul.addr %s892, 256
          %s894 = scalar_lea.vmem [#allocation8], %s893
          %895 = dma.done %s891, 4096
        $region59: #{tpu_custom_call.1} parent=54 // pred_fallthru
          _
      $region55: #{tpu_custom_call.1} parent=5 // pred_fallthru
        _
    $region6: #{tpu_custom_call.1} parent=1 // loop_footer
      %s20 = sadd.s32 1, %s16
    $region7: #{tpu_custom_call.1} parent=1 // loop_footer_branch
      %15 = sbr.rel target = $region3
    $region8: #{tpu_custom_call.1} parent=1 // loop_exit
      _
    %896 = vsyncpa [#allocation4], 1
    %s897 = scalar_lea.sflag [#allocation4], 1
    %898 = vsyncpa %s897, 1
    %899 = vsyncpa [#allocation7], 1
    %900 = vsyncpa [#allocation5], 1
    %s901 = scalar_lea.sflag [#allocation5], 1
    %902 = vsyncpa %s901, 1

</llo_original>
